<compile_context>
chip_gen: v7x
topology: tpu7x:2x2x1
jax: 0.10.0
libtpu: 0.0.40
codegen_flags: <defaults>
</compile_context>

<pallas_src>
import functools

import jax
import jax.numpy as jnp
from jax.experimental import pallas as pl
from jax.experimental.pallas import tpu as pltpu

IN_F = 28 * 28       # 784 input features (kept un-padded; full-width blocks)
HID = 100
HID_PAD = 128        # lane-dense hidden width
OUT = 10
OUT_PAD = 128        # lane-dense logits width


def _mlp_body(x, w1_ref, b1_ref, w2_ref, b2_ref, w3_ref, b3_ref):
    """bf16 x bf16 MXU matmuls with f32 accumulation; bias / ReLU in f32."""
    h1 = jnp.dot(x, w1_ref[...], preferred_element_type=jnp.float32) + b1_ref[...]
    h1 = jnp.maximum(h1, 0.0)
    h2 = jnp.dot(h1.astype(jnp.bfloat16), w2_ref[...],
                 preferred_element_type=jnp.float32) + b2_ref[...]
    h2 = jnp.maximum(h2, 0.0)
    return jnp.dot(h2.astype(jnp.bfloat16), w3_ref[...],
                   preferred_element_type=jnp.float32) + b3_ref[...]


def mlp_softmax_kernel(x_ref, w1_ref, b1_ref, w2_ref, b2_ref, w3_ref, b3_ref, o_ref):
    """Single-block path: whole batch in VMEM -> fuse the dim=0 softmax."""
    z = _mlp_body(x_ref[...], w1_ref, b1_ref, w2_ref, b2_ref, w3_ref, b3_ref)
    m = jnp.max(z, axis=0, keepdims=True)
    e = jnp.exp(z - m)
    o_ref[...] = e / jnp.sum(e, axis=0, keepdims=True)


def mlp_logits_kernel(x_ref, w1_ref, b1_ref, w2_ref, b2_ref, w3_ref, b3_ref, o_ref):
    """Batch-tiled path: logits only (dim=0 softmax spans batch tiles)."""
    o_ref[...] = _mlp_body(x_ref[...], w1_ref, b1_ref, w2_ref, b2_ref, w3_ref, b3_ref)


def init_params(key):
    """Deterministic init mirroring nn.Linear's U(-1/sqrt(in), 1/sqrt(in)).

    Logical (unpadded) shapes, weights stored (in, out) so y = x @ W + b.
    """
    dims = [(IN_F, HID), (HID, HID), (HID, OUT)]
    params = []
    for fan_in, fan_out in dims:
        key, kw, kb = jax.random.split(key, 3)
        bound = 1.0 / (fan_in ** 0.5)
        w = jax.random.uniform(kw, (fan_in, fan_out), jnp.float32, -bound, bound)
        b = jax.random.uniform(kb, (1, fan_out), jnp.float32, -bound, bound)
        params += [w, b]
    return tuple(params)


def pack_params(params):
    """One-time packing: zero-pad output widths to 128 lanes, weights to bf16."""
    w1, b1, w2, b2, w3, b3 = params
    w1p = jnp.zeros((IN_F, HID_PAD), jnp.float32).at[:, :HID].set(w1)
    w2p = jnp.zeros((HID_PAD, HID_PAD), jnp.float32).at[:HID, :HID].set(w2)
    w3p = jnp.zeros((HID_PAD, OUT_PAD), jnp.float32).at[:HID, :OUT].set(w3)
    b1p = jnp.zeros((1, HID_PAD), jnp.float32).at[:, :HID].set(b1)
    b2p = jnp.zeros((1, HID_PAD), jnp.float32).at[:, :HID].set(b2)
    b3p = jnp.zeros((1, OUT_PAD), jnp.float32).at[:, :OUT].set(b3)
    return (w1p.astype(jnp.bfloat16), b1p,
            w2p.astype(jnp.bfloat16), b2p,
            w3p.astype(jnp.bfloat16), b3p)


def _round_up(a, m):
    return ((a + m - 1) // m) * m


@functools.partial(jax.jit, static_argnames=("batch_tile",))
def mymodel_forward(x_nchw, packed_params, batch_tile=1024):
    """x_nchw: [B, 1, 28, 28] float32 -> probabilities [B, 10] (softmax over dim=0)."""
    w1, b1, w2, b2, w3, b3 = packed_params
    B = x_nchw.shape[0]
    # x.view(-1, 784) fused with the bf16 cast: halves x HBM traffic and the
    # x VMEM blocks, removes the per-tile VPU cast inside the kernel.
    x2d = x_nchw.reshape(B, IN_F).astype(jnp.bfloat16)

    flops_per_row = 2 * (IN_F * HID_PAD + HID_PAD * HID_PAD + HID_PAD * OUT_PAD)
    weight_bytes = ((w1.size + w2.size + w3.size) * 2
                    + (b1.size + b2.size + b3.size) * 4)

    if B <= batch_tile:
        # Whole batch is a single block (block shape == full array shape, so no
        # batch padding needed) -> fuse the dim=0 softmax into the same kernel.
        probs = pl.pallas_call(
            mlp_softmax_kernel,
            out_shape=jax.ShapeDtypeStruct((B, OUT_PAD), jnp.float32),
            grid=(1,),
            in_specs=[
                pl.BlockSpec((B, IN_F), lambda i: (0, 0)),
                pl.BlockSpec((IN_F, HID_PAD), lambda i: (0, 0)),
                pl.BlockSpec((1, HID_PAD), lambda i: (0, 0)),
                pl.BlockSpec((HID_PAD, HID_PAD), lambda i: (0, 0)),
                pl.BlockSpec((1, HID_PAD), lambda i: (0, 0)),
                pl.BlockSpec((HID_PAD, OUT_PAD), lambda i: (0, 0)),
                pl.BlockSpec((1, OUT_PAD), lambda i: (0, 0)),
            ],
            out_specs=pl.BlockSpec((B, OUT_PAD), lambda i: (0, 0)),
            cost_estimate=pl.CostEstimate(
                flops=B * flops_per_row,
                transcendentals=B * OUT_PAD,
                bytes_accessed=B * IN_F * 2 + weight_bytes + B * OUT_PAD * 4),
        )(x2d, w1, b1, w2, b2, w3, b3)
        # Drop padded logit columns (all-zero -> uniform probs, never used).
        return probs[:, :OUT]

    # ---- Batch-tiled path (large B) ----------------------------------------
    # Tile so there are always >= 2 grid steps (v7x megacore gets both cores
    # busy); pad only the batch dim, keep x bf16 end to end.
    tb = min(batch_tile, _round_up(pl.cdiv(B, 2), 16))
    b_pad = _round_up(B, tb)
    xp = jnp.zeros((b_pad, IN_F), jnp.bfloat16).at[:B].set(x2d)
    n_tiles = b_pad // tb

    batch_block = lambda shape: pl.BlockSpec(shape, lambda i: (i, 0))
    # Constant index_map -> weights stay VMEM-resident across batch tiles;
    # Buffered(1) avoids allocating a useless second copy of each weight.
    resident = lambda shape: pl.BlockSpec(shape, lambda i: (0, 0),
                                          pipeline_mode=pl.Buffered(1))

    logits = pl.pallas_call(
        mlp_logits_kernel,
        out_shape=jax.ShapeDtypeStruct((b_pad, OUT_PAD), jnp.float32),
        grid=(n_tiles,),
        in_specs=[
            batch_block((tb, IN_F)),
            resident((IN_F, HID_PAD)), resident((1, HID_PAD)),
            resident((HID_PAD, HID_PAD)), resident((1, HID_PAD)),
            resident((HID_PAD, OUT_PAD)), resident((1, OUT_PAD)),
        ],
        out_specs=batch_block((tb, OUT_PAD)),
        compiler_params=pltpu.CompilerParams(
            dimension_semantics=("parallel",)),
        cost_estimate=pl.CostEstimate(
            flops=b_pad * flops_per_row,
            transcendentals=0,
            bytes_accessed=b_pad * IN_F * 2 + weight_bytes + b_pad * OUT_PAD * 4),
    )(xp, w1, b1, w2, b2, w3, b3)

    # softmax over dim=0 spans batch tiles: drop padded rows/columns and let
    # XLA do the tiny [B, 10] column-wise softmax (no second custom call).
    return jax.nn.softmax(logits[:B, :OUT], axis=0)


def _reference_forward(x_nchw, params):
    """Pure-JAX f32 reference matching the PyTorch module."""
    w1, b1, w2, b2, w3, b3 = params
    x = x_nchw.reshape(x_nchw.shape[0], IN_F)
    h1 = jnp.maximum(x @ w1 + b1, 0.0)
    h2 = jnp.maximum(h1 @ w2 + b2, 0.0)
    logits = h2 @ w3 + b3
    return jax.nn.softmax(logits, axis=0)


if __name__ == "__main__":
    key = jax.random.PRNGKey(0)
    key, kx1, kx2 = jax.random.split(key, 3)

    params = init_params(key)
    packed = pack_params(params)

    # Path 1: small batch -> single fused block (MLP + dim=0 softmax, 1 kernel).
    batch = 8
    x = jax.random.normal(kx1, (batch, 1, 28, 28), dtype=jnp.float32)
    out = jax.block_until_ready(mymodel_forward(x, packed))
    assert out.shape == (batch, 10)
    # softmax over dim=0 -> each of the 10 columns sums to 1 over the batch.
    col_sums = jnp.sum(out, axis=0)
    assert bool(jnp.allclose(col_sums, jnp.ones_like(col_sums), atol=1e-4))
    ref = _reference_forward(x, params)
    assert bool(jnp.allclose(out, ref, atol=2e-2)), float(jnp.max(jnp.abs(out - ref)))

    # Path 2: force the batch-tiled grid (3 tiles) + plain-JAX dim=0 softmax.
    batch2 = 40
    x2 = jax.random.normal(kx2, (batch2, 1, 28, 28), dtype=jnp.float32)
    out2 = jax.block_until_ready(mymodel_forward(x2, packed, batch_tile=16))
    assert out2.shape == (batch2, 10)
    ref2 = _reference_forward(x2, params)
    assert bool(jnp.allclose(out2, ref2, atol=2e-2)), float(jnp.max(jnp.abs(out2 - ref2)))

    print("KERNEL_OK")
</pallas_src>

<mosaic_0001>
module attributes {stable_mosaic.version = 11 : i64} {
  func.func @mlp_softmax_kernel(%arg0: i32, %arg1: memref<8x784xbf16, #tpu.memory_space<vmem>>, %arg2: memref<784x128xbf16, #tpu.memory_space<vmem>>, %arg3: memref<1x128xf32, #tpu.memory_space<vmem>>, %arg4: memref<128x128xbf16, #tpu.memory_space<vmem>>, %arg5: memref<1x128xf32, #tpu.memory_space<vmem>>, %arg6: memref<128x128xbf16, #tpu.memory_space<vmem>>, %arg7: memref<1x128xf32, #tpu.memory_space<vmem>>, %arg8: memref<8x128xf32, #tpu.memory_space<vmem>>) attributes {dimension_semantics = [#tpu.dimension_semantics<arbitrary>], iteration_bounds = array<i64: 1>, scalar_prefetch = 0 : i64, scratch_operands = 0 : i64, tpu.core_type = #tpu.core_type<tc>, window_params = [{pipeline_mode = #tpu.pipeline_mode<synchronous>, transform_indices = @transform_0, window_bounds = array<i64: 8, 784>}, {pipeline_mode = #tpu.pipeline_mode<synchronous>, transform_indices = @transform_1, window_bounds = array<i64: 784, 128>}, {pipeline_mode = #tpu.pipeline_mode<synchronous>, transform_indices = @transform_2, window_bounds = array<i64: 1, 128>}, {pipeline_mode = #tpu.pipeline_mode<synchronous>, transform_indices = @transform_3, window_bounds = array<i64: 128, 128>}, {pipeline_mode = #tpu.pipeline_mode<synchronous>, transform_indices = @transform_4, window_bounds = array<i64: 1, 128>}, {pipeline_mode = #tpu.pipeline_mode<synchronous>, transform_indices = @transform_5, window_bounds = array<i64: 128, 128>}, {pipeline_mode = #tpu.pipeline_mode<synchronous>, transform_indices = @transform_6, window_bounds = array<i64: 1, 128>}, {pipeline_mode = #tpu.pipeline_mode<synchronous>, transform_indices = @transform_7, window_bounds = array<i64: 8, 128>}]} {
    %c0 = arith.constant 0 : index
    %c0_0 = arith.constant 0 : index
    %0 = vector.load %arg1[%c0, %c0_0] : memref<8x784xbf16, #tpu.memory_space<vmem>>, vector<8x784xbf16>
    %c0_1 = arith.constant 0 : index
    %c0_2 = arith.constant 0 : index
    %1 = vector.load %arg2[%c0_1, %c0_2] : memref<784x128xbf16, #tpu.memory_space<vmem>>, vector<784x128xbf16>
    %cst = arith.constant dense<0.000000e+00> : vector<8x128xf32>
    %2 = tpu.matmul %0, %1, %cst {dimension_numbers = #tpu.dot_dimension_numbers<[1], [0], [0], [1], [0, 0, 1, 1], [], []>} : vector<8x784xbf16>, vector<784x128xbf16>, vector<8x128xf32> -> vector<8x128xf32>
    %c0_3 = arith.constant 0 : index
    %c0_4 = arith.constant 0 : index
    %3 = vector.load %arg3[%c0_3, %c0_4] : memref<1x128xf32, #tpu.memory_space<vmem>>, vector<1x128xf32>
    %4 = vector.broadcast %3 : vector<1x128xf32> to vector<8x128xf32>
    %5 = arith.addf %2, %4 : vector<8x128xf32>
    %cst_5 = arith.constant 0.000000e+00 : f32
    %6 = vector.broadcast %cst_5 : f32 to vector<8x128xf32>
    %7 = arith.maximumf %5, %6 : vector<8x128xf32>
    %8 = arith.truncf %7 : vector<8x128xf32> to vector<8x128xbf16>
    %c0_6 = arith.constant 0 : index
    %c0_7 = arith.constant 0 : index
    %9 = vector.load %arg4[%c0_6, %c0_7] : memref<128x128xbf16, #tpu.memory_space<vmem>>, vector<128x128xbf16>
    %cst_8 = arith.constant dense<0.000000e+00> : vector<8x128xf32>
    %10 = tpu.matmul %8, %9, %cst_8 {dimension_numbers = #tpu.dot_dimension_numbers<[1], [0], [0], [1], [0, 0, 1, 1], [], []>} : vector<8x128xbf16>, vector<128x128xbf16>, vector<8x128xf32> -> vector<8x128xf32>
    %c0_9 = arith.constant 0 : index
    %c0_10 = arith.constant 0 : index
    %11 = vector.load %arg5[%c0_9, %c0_10] : memref<1x128xf32, #tpu.memory_space<vmem>>, vector<1x128xf32>
    %12 = vector.broadcast %11 : vector<1x128xf32> to vector<8x128xf32>
    %13 = arith.addf %10, %12 : vector<8x128xf32>
    %cst_11 = arith.constant 0.000000e+00 : f32
    %14 = vector.broadcast %cst_11 : f32 to vector<8x128xf32>
    %15 = arith.maximumf %13, %14 : vector<8x128xf32>
    %16 = arith.truncf %15 : vector<8x128xf32> to vector<8x128xbf16>
    %c0_12 = arith.constant 0 : index
    %c0_13 = arith.constant 0 : index
    %17 = vector.load %arg6[%c0_12, %c0_13] : memref<128x128xbf16, #tpu.memory_space<vmem>>, vector<128x128xbf16>
    %cst_14 = arith.constant dense<0.000000e+00> : vector<8x128xf32>
    %18 = tpu.matmul %16, %17, %cst_14 {dimension_numbers = #tpu.dot_dimension_numbers<[1], [0], [0], [1], [0, 0, 1, 1], [], []>} : vector<8x128xbf16>, vector<128x128xbf16>, vector<8x128xf32> -> vector<8x128xf32>
    %c0_15 = arith.constant 0 : index
    %c0_16 = arith.constant 0 : index
    %19 = vector.load %arg7[%c0_15, %c0_16] : memref<1x128xf32, #tpu.memory_space<vmem>>, vector<1x128xf32>
    %20 = vector.broadcast %19 : vector<1x128xf32> to vector<8x128xf32>
    %21 = arith.addf %18, %20 : vector<8x128xf32>
    %cst_17 = arith.constant dense<0xFF800000> : vector<128xf32>
    %22 = vector.multi_reduction <maximumf>, %21, %cst_17 [0] : vector<8x128xf32> to vector<128xf32>
    %23 = vector.shape_cast %22 : vector<128xf32> to vector<1x128xf32>
    %24 = vector.broadcast %23 : vector<1x128xf32> to vector<8x128xf32>
    %25 = arith.subf %21, %24 : vector<8x128xf32>
    %26 = math.exp %25 : vector<8x128xf32>
    %cst_18 = arith.constant dense<0.000000e+00> : vector<128xf32>
    %27 = vector.multi_reduction <add>, %26, %cst_18 [0] : vector<8x128xf32> to vector<128xf32>
    %28 = vector.shape_cast %27 : vector<128xf32> to vector<1x128xf32>
    %29 = vector.broadcast %28 : vector<1x128xf32> to vector<8x128xf32>
    %30 = arith.divf %26, %29 : vector<8x128xf32>
    %c0_19 = arith.constant 0 : index
    %c0_20 = arith.constant 0 : index
    %31 = vector.load %arg8[%c0_19, %c0_20] : memref<8x128xf32, #tpu.memory_space<vmem>>, vector<8x128xf32>
    tpu.vector_store %arg8[%c0_19, %c0_20], %30 {strides = array<i32>} : memref<8x128xf32, #tpu.memory_space<vmem>>, vector<8x128xf32>,
    return
  }
  func.func @transform_0(%arg0: i32) -> (i32, i32) {
    %c0_i32 = arith.constant 0 : i32
    %c0_i32_0 = arith.constant 0 : i32
    %c0_i32_1 = arith.constant 0 : i32
    return %c0_i32, %c0_i32_0 : i32, i32
  }
  func.func @transform_1(%arg0: i32) -> (i32, i32) {
    %c0_i32 = arith.constant 0 : i32
    %c0_i32_0 = arith.constant 0 : i32
    %c0_i32_1 = arith.constant 0 : i32
    return %c0_i32, %c0_i32_0 : i32, i32
  }
  func.func @transform_2(%arg0: i32) -> (i32, i32) {
    %c0_i32 = arith.constant 0 : i32
    %c0_i32_0 = arith.constant 0 : i32
    %c0_i32_1 = arith.constant 0 : i32
    return %c0_i32, %c0_i32_0 : i32, i32
  }
  func.func @transform_3(%arg0: i32) -> (i32, i32) {
    %c0_i32 = arith.constant 0 : i32
    %c0_i32_0 = arith.constant 0 : i32
    %c0_i32_1 = arith.constant 0 : i32
    return %c0_i32, %c0_i32_0 : i32, i32
  }
  func.func @transform_4(%arg0: i32) -> (i32, i32) {
    %c0_i32 = arith.constant 0 : i32
    %c0_i32_0 = arith.constant 0 : i32
    %c0_i32_1 = arith.constant 0 : i32
    return %c0_i32, %c0_i32_0 : i32, i32
  }
  func.func @transform_5(%arg0: i32) -> (i32, i32) {
    %c0_i32 = arith.constant 0 : i32
    %c0_i32_0 = arith.constant 0 : i32
    %c0_i32_1 = arith.constant 0 : i32
    return %c0_i32, %c0_i32_0 : i32, i32
  }
  func.func @transform_6(%arg0: i32) -> (i32, i32) {
    %c0_i32 = arith.constant 0 : i32
    %c0_i32_0 = arith.constant 0 : i32
    %c0_i32_1 = arith.constant 0 : i32
    return %c0_i32, %c0_i32_0 : i32, i32
  }
  func.func @transform_7(%arg0: i32) -> (i32, i32) {
    %c0_i32 = arith.constant 0 : i32
    %c0_i32_0 = arith.constant 0 : i32
    %c0_i32_1 = arith.constant 0 : i32
    return %c0_i32, %c0_i32_0 : i32, i32
  }
}

</mosaic_0001>

<llo_original>
// kernel: mymodel_forward.1
$region0: #{mymodel_forward.1}
  #allocation0 [shape = 'u32[]', space=smem, size = 0x4, offset = 0x4, fixed_abs, tag = 'smem constant byte address 0x4 - core index']
  #allocation1 [shape = 'u32[144,128]{1,0:T(1,128)}', space=vmem, size = 0x12000, scoped, tag = 'internal scratch']
  %s0 = inlined_call_operand.vmem [shape: bf16[8,784], index: 0, kind: input, shape index: {}]
  %s1 = inlined_call_operand.vmem [shape: bf16[784,128], index: 1, kind: input, shape index: {}]
  %s2 = inlined_call_operand.vmem [shape: f32[1,128], index: 2, kind: input, shape index: {}]
  %s3 = inlined_call_operand.vmem [shape: bf16[128,128], index: 3, kind: input, shape index: {}]
  %s4 = inlined_call_operand.vmem [shape: f32[1,128], index: 4, kind: input, shape index: {}]
  %s5 = inlined_call_operand.vmem [shape: bf16[128,128], index: 5, kind: input, shape index: {}]
  %s6 = inlined_call_operand.vmem [shape: f32[1,128], index: 6, kind: input, shape index: {}]
  %s7 = inlined_call_operand.hbm [shape: f32[8,128], index: 7, kind: output, shape index: {}]
  %s8 = sld [smem:[#allocation0]]
  $region38: #{mymodel_forward.1} parent=0
    _
  %s10 = ssub.s32 1, %s8
  %s11 = scalar_select 0, %s10, %s8
  $region1: #{mymodel_forward.1} parent=0
    #allocation2 [shape = 'u8[4096]{0}', space=vmem, size = 0x1000, scoped, tag = 'output window, operand 0, single buffered']
    #allocation3 [shape = 's32[1]{0}', space=sflag, size = 0x4, scoped, tag = 'scoped memory for mymodel_forward.1']
    %12 = vsyncpa [#allocation3], 0
    // Predicated region
    $region2: #{mymodel_forward.1} parent=1 // pred_check
      _
    $region3: #{mymodel_forward.1} parent=1 // pred_check_branch
      %14 = sbr.rel (0) target = $region5
    $region4: #{mymodel_forward.1} parent=1 // pred_region
      _
    $region5: #{mymodel_forward.1} parent=1 // pred_fallthru
      _
    // Predicated region
    $region6: #{mymodel_forward.1} parent=1 // pred_check
      _
    $region7: #{mymodel_forward.1} parent=1 // pred_check_branch
      %16 = sbr.rel (0) target = $region9
    $region8: #{mymodel_forward.1} parent=1 // pred_region
      _
    $region9: #{mymodel_forward.1} parent=1 // pred_fallthru
      _
    // Predicated region
    $region10: #{mymodel_forward.1} parent=1 // pred_check
      _
    $region11: #{mymodel_forward.1} parent=1 // pred_check_branch
      %18 = sbr.rel (0) target = $region13
    $region12: #{mymodel_forward.1} parent=1 // pred_region
      _
    $region13: #{mymodel_forward.1} parent=1 // pred_fallthru
      _
    // Predicated region
    $region14: #{mymodel_forward.1} parent=1 // pred_check
      _
    $region15: #{mymodel_forward.1} parent=1 // pred_check_branch
      %20 = sbr.rel (0) target = $region17
    $region16: #{mymodel_forward.1} parent=1 // pred_region
      _
    $region17: #{mymodel_forward.1} parent=1 // pred_fallthru
      _
    // Predicated region
    $region18: #{mymodel_forward.1} parent=1 // pred_check
      _
    $region19: #{mymodel_forward.1} parent=1 // pred_check_branch
      %22 = sbr.rel (0) target = $region21
    $region20: #{mymodel_forward.1} parent=1 // pred_region
      _
    $region21: #{mymodel_forward.1} parent=1 // pred_fallthru
      _
    // Predicated region
    $region22: #{mymodel_forward.1} parent=1 // pred_check
      _
    $region23: #{mymodel_forward.1} parent=1 // pred_check_branch
      %24 = sbr.rel (0) target = $region25
    $region24: #{mymodel_forward.1} parent=1 // pred_region
      _
    $region25: #{mymodel_forward.1} parent=1 // pred_fallthru
      _
    // Predicated region
    $region26: #{mymodel_forward.1} parent=1 // pred_check
      _
    $region27: #{mymodel_forward.1} parent=1 // pred_check_branch
      %26 = sbr.rel (0) target = $region29
    $region28: #{mymodel_forward.1} parent=1 // pred_region
      _
    $region29: #{mymodel_forward.1} parent=1 // pred_fallthru
      _
    %v28 = vld [vmem:[%s0] sm:$0xff]
    %v29 = vld [vmem:[%s0 + $0x8] sm:$0xff]
    %v30 = vld [vmem:[%s0 + $0x10] sm:$0xff]
    %v31 = vld [vmem:[%s0 + $0x18] sm:$0xf]
    %v32 = vld [vmem:[%s1] sm:$0xf]
    %v33 = vld [vmem:[%s1 + $0x4] sm:$0xf]
    %v34 = vld [vmem:[%s1 + $0x8] sm:$0xf]
    %v35 = vld [vmem:[%s1 + $0xc] sm:$0xf]
    %v36 = vld [vmem:[%s1 + $0x10] sm:$0xf]
    %v37 = vld [vmem:[%s1 + $0x14] sm:$0xf]
    %v38 = vld [vmem:[%s1 + $0x18] sm:$0xf]
    %v39 = vld [vmem:[%s1 + $0x1c] sm:$0xf]
    %v40 = vld [vmem:[%s1 + $0x20] sm:$0xf]
    %v41 = vld [vmem:[%s1 + $0x24] sm:$0xf]
    %v42 = vld [vmem:[%s1 + $0x28] sm:$0xf]
    %v43 = vld [vmem:[%s1 + $0x2c] sm:$0xf]
    %v44 = vld [vmem:[%s1 + $0x30] sm:$0xf]
    %v45 = vld [vmem:[%s1 + $0x34] sm:$0xf]
    %v46 = vld [vmem:[%s1 + $0x38] sm:$0xf]
    %v47 = vld [vmem:[%s1 + $0x3c] sm:$0xf]
    %v48 = vld [vmem:[%s1 + $0x40] sm:$0xf]
    %v49 = vld [vmem:[%s1 + $0x44] sm:$0xf]
    %v50 = vld [vmem:[%s1 + $0x48] sm:$0xf]
    %v51 = vld [vmem:[%s1 + $0x4c] sm:$0xf]
    %v52 = vld [vmem:[%s1 + $0x50] sm:$0xf]
    %v53 = vld [vmem:[%s1 + $0x54] sm:$0xf]
    %v54 = vld [vmem:[%s1 + $0x58] sm:$0xf]
    %v55 = vld [vmem:[%s1 + $0x5c] sm:$0xf]
    %v56 = vld [vmem:[%s1 + $0x60] sm:$0xf]
    %v57 = vld [vmem:[%s1 + $0x64] sm:$0xf]
    %v58 = vld [vmem:[%s1 + $0x68] sm:$0xf]
    %v59 = vld [vmem:[%s1 + $0x6c] sm:$0xf]
    %v60 = vld [vmem:[%s1 + $0x70] sm:$0xf]
    %v61 = vld [vmem:[%s1 + $0x74] sm:$0xf]
    %v62 = vld [vmem:[%s1 + $0x78] sm:$0xf]
    %v63 = vld [vmem:[%s1 + $0x7c] sm:$0xf]
    %v64 = vld [vmem:[%s1 + $0x80] sm:$0xf]
    %v65 = vld [vmem:[%s1 + $0x84] sm:$0xf]
    %v66 = vld [vmem:[%s1 + $0x88] sm:$0xf]
    %v67 = vld [vmem:[%s1 + $0x8c] sm:$0xf]
    %v68 = vld [vmem:[%s1 + $0x90] sm:$0xf]
    %v69 = vld [vmem:[%s1 + $0x94] sm:$0xf]
    %v70 = vld [vmem:[%s1 + $0x98] sm:$0xf]
    %v71 = vld [vmem:[%s1 + $0x9c] sm:$0xf]
    %v72 = vld [vmem:[%s1 + $0xa0] sm:$0xf]
    %v73 = vld [vmem:[%s1 + $0xa4] sm:$0xf]
    %v74 = vld [vmem:[%s1 + $0xa8] sm:$0xf]
    %v75 = vld [vmem:[%s1 + $0xac] sm:$0xf]
    %v76 = vld [vmem:[%s1 + $0xb0] sm:$0xf]
    %v77 = vld [vmem:[%s1 + $0xb4] sm:$0xf]
    %v78 = vld [vmem:[%s1 + $0xb8] sm:$0xf]
    %v79 = vld [vmem:[%s1 + $0xbc] sm:$0xf]
    %v80 = vld [vmem:[%s1 + $0xc0] sm:$0xf]
    %v81 = vld [vmem:[%s1 + $0xc4] sm:$0xf]
    %v82 = vld [vmem:[%s1 + $0xc8] sm:$0xf]
    %v83 = vld [vmem:[%s1 + $0xcc] sm:$0xf]
    %v84 = vld [vmem:[%s1 + $0xd0] sm:$0xf]
    %v85 = vld [vmem:[%s1 + $0xd4] sm:$0xf]
    %v86 = vld [vmem:[%s1 + $0xd8] sm:$0xf]
    %v87 = vld [vmem:[%s1 + $0xdc] sm:$0xf]
    %v88 = vld [vmem:[%s1 + $0xe0] sm:$0xf]
    %v89 = vld [vmem:[%s1 + $0xe4] sm:$0xf]
    %v90 = vld [vmem:[%s1 + $0xe8] sm:$0xf]
    %v91 = vld [vmem:[%s1 + $0xec] sm:$0xf]
    %v92 = vld [vmem:[%s1 + $0xf0] sm:$0xf]
    %v93 = vld [vmem:[%s1 + $0xf4] sm:$0xf]
    %v94 = vld [vmem:[%s1 + $0xf8] sm:$0xf]
    %v95 = vld [vmem:[%s1 + $0xfc] sm:$0xf]
    %v96 = vld [vmem:[%s1 + $0x100] sm:$0xf]
    %v97 = vld [vmem:[%s1 + $0x104] sm:$0xf]
    %v98 = vld [vmem:[%s1 + $0x108] sm:$0xf]
    %v99 = vld [vmem:[%s1 + $0x10c] sm:$0xf]
    %v100 = vld [vmem:[%s1 + $0x110] sm:$0xf]
    %v101 = vld [vmem:[%s1 + $0x114] sm:$0xf]
    %v102 = vld [vmem:[%s1 + $0x118] sm:$0xf]
    %v103 = vld [vmem:[%s1 + $0x11c] sm:$0xf]
    %v104 = vld [vmem:[%s1 + $0x120] sm:$0xf]
    %v105 = vld [vmem:[%s1 + $0x124] sm:$0xf]
    %v106 = vld [vmem:[%s1 + $0x128] sm:$0xf]
    %v107 = vld [vmem:[%s1 + $0x12c] sm:$0xf]
    %v108 = vld [vmem:[%s1 + $0x130] sm:$0xf]
    %v109 = vld [vmem:[%s1 + $0x134] sm:$0xf]
    %v110 = vld [vmem:[%s1 + $0x138] sm:$0xf]
    %v111 = vld [vmem:[%s1 + $0x13c] sm:$0xf]
    %v112 = vld [vmem:[%s1 + $0x140] sm:$0xf]
    %v113 = vld [vmem:[%s1 + $0x144] sm:$0xf]
    %v114 = vld [vmem:[%s1 + $0x148] sm:$0xf]
    %v115 = vld [vmem:[%s1 + $0x14c] sm:$0xf]
    %v116 = vld [vmem:[%s1 + $0x150] sm:$0xf]
    %v117 = vld [vmem:[%s1 + $0x154] sm:$0xf]
    %v118 = vld [vmem:[%s1 + $0x158] sm:$0xf]
    %v119 = vld [vmem:[%s1 + $0x15c] sm:$0xf]
    %v120 = vld [vmem:[%s1 + $0x160] sm:$0xf]
    %v121 = vld [vmem:[%s1 + $0x164] sm:$0xf]
    %v122 = vld [vmem:[%s1 + $0x168] sm:$0xf]
    %v123 = vld [vmem:[%s1 + $0x16c] sm:$0xf]
    %v124 = vld [vmem:[%s1 + $0x170] sm:$0xf]
    %v125 = vld [vmem:[%s1 + $0x174] sm:$0xf]
    %v126 = vld [vmem:[%s1 + $0x178] sm:$0xf]
    %v127 = vld [vmem:[%s1 + $0x17c] sm:$0xf]
    %v128 = vld [vmem:[%s1 + $0x180] sm:$0xf]
    %v129 = vld [vmem:[%s1 + $0x184] sm:$0xf]
    %v130 = vld [vmem:[%s2] sm:$0x1]
    %v132 = vlaneseq
    %v133 = vshrl.u32 %v132, 7
    %v134 = vsub.s32 0, %v133
    %v135 = vrot.slane %v130, %v134
    %v141 = vunpack.c.l.b16 %v28
    %v142 = vunpack.c.h.b16 %v28
    %v143 = vunpack.c.l.b16 %v29
    %v144 = vunpack.c.h.b16 %v29
    %v145 = vunpack.c.l.b16 %v30
    %v146 = vunpack.c.h.b16 %v30
    %v147 = vunpack.c.l.b16 %v31
    %v148 = vpack.c.b16 %v141, %v141
    %v149 = vpack.c.b16 %v142, %v142
    %v150 = vpack.c.b16 %v143, %v143
    %v151 = vpack.c.b16 %v144, %v144
    %v152 = vpack.c.b16 %v145, %v145
    %v153 = vpack.c.b16 %v146, %v146
    %v154 = vpack.c.b16 %v147, %v147
    %v259 = vunpack.c.l.b16 %v32
    %v260 = vunpack.c.l.b16 %v33
    %v261 = vunpack.c.l.b16 %v34
    %v262 = vunpack.c.l.b16 %v35
    %v263 = vunpack.c.l.b16 %v36
    %v264 = vunpack.c.l.b16 %v37
    %v265 = vunpack.c.l.b16 %v38
    %v266 = vunpack.c.l.b16 %v39
    %v267 = vunpack.c.l.b16 %v40
    %v268 = vunpack.c.l.b16 %v41
    %v269 = vunpack.c.l.b16 %v42
    %v270 = vunpack.c.l.b16 %v43
    %v271 = vunpack.c.l.b16 %v44
    %v272 = vunpack.c.l.b16 %v45
    %v273 = vunpack.c.l.b16 %v46
    %v274 = vunpack.c.l.b16 %v47
    %v275 = vunpack.c.l.b16 %v48
    %v276 = vunpack.c.l.b16 %v49
    %v277 = vunpack.c.l.b16 %v50
    %v278 = vunpack.c.l.b16 %v51
    %v279 = vunpack.c.l.b16 %v52
    %v280 = vunpack.c.l.b16 %v53
    %v281 = vunpack.c.l.b16 %v54
    %v282 = vunpack.c.l.b16 %v55
    %v283 = vunpack.c.l.b16 %v56
    %v284 = vunpack.c.l.b16 %v57
    %v285 = vunpack.c.l.b16 %v58
    %v286 = vunpack.c.l.b16 %v59
    %v287 = vunpack.c.l.b16 %v60
    %v288 = vunpack.c.l.b16 %v61
    %v289 = vunpack.c.l.b16 %v62
    %v290 = vunpack.c.l.b16 %v63
    %v291 = vunpack.c.l.b16 %v64
    %v292 = vunpack.c.l.b16 %v65
    %v293 = vunpack.c.l.b16 %v66
    %v294 = vunpack.c.l.b16 %v67
    %v295 = vunpack.c.l.b16 %v68
    %v296 = vunpack.c.l.b16 %v69
    %v297 = vunpack.c.l.b16 %v70
    %v298 = vunpack.c.l.b16 %v71
    %v299 = vunpack.c.l.b16 %v72
    %v300 = vunpack.c.l.b16 %v73
    %v301 = vunpack.c.l.b16 %v74
    %v302 = vunpack.c.l.b16 %v75
    %v303 = vunpack.c.l.b16 %v76
    %v304 = vunpack.c.l.b16 %v77
    %v305 = vunpack.c.l.b16 %v78
    %v306 = vunpack.c.l.b16 %v79
    %v307 = vunpack.c.l.b16 %v80
    %v308 = vunpack.c.l.b16 %v81
    %v309 = vunpack.c.l.b16 %v82
    %v310 = vunpack.c.l.b16 %v83
    %v311 = vunpack.c.l.b16 %v84
    %v312 = vunpack.c.l.b16 %v85
    %v313 = vunpack.c.l.b16 %v86
    %v314 = vunpack.c.l.b16 %v87
    %v315 = vunpack.c.l.b16 %v88
    %v316 = vunpack.c.l.b16 %v89
    %v317 = vunpack.c.l.b16 %v90
    %v318 = vunpack.c.l.b16 %v91
    %v319 = vunpack.c.l.b16 %v92
    %v320 = vunpack.c.l.b16 %v93
    %v321 = vunpack.c.l.b16 %v94
    %v322 = vunpack.c.l.b16 %v95
    %v323 = vunpack.c.l.b16 %v96
    %v324 = vunpack.c.l.b16 %v97
    %v325 = vunpack.c.l.b16 %v98
    %v326 = vunpack.c.l.b16 %v99
    %v327 = vunpack.c.l.b16 %v100
    %v328 = vunpack.c.l.b16 %v101
    %v329 = vunpack.c.l.b16 %v102
    %v330 = vunpack.c.l.b16 %v103
    %v331 = vunpack.c.l.b16 %v104
    %v332 = vunpack.c.l.b16 %v105
    %v333 = vunpack.c.l.b16 %v106
    %v334 = vunpack.c.l.b16 %v107
    %v335 = vunpack.c.l.b16 %v108
    %v336 = vunpack.c.l.b16 %v109
    %v337 = vunpack.c.l.b16 %v110
    %v338 = vunpack.c.l.b16 %v111
    %v339 = vunpack.c.l.b16 %v112
    %v340 = vunpack.c.l.b16 %v113
    %v341 = vunpack.c.l.b16 %v114
    %v342 = vunpack.c.l.b16 %v115
    %v343 = vunpack.c.l.b16 %v116
    %v344 = vunpack.c.l.b16 %v117
    %v345 = vunpack.c.l.b16 %v118
    %v346 = vunpack.c.l.b16 %v119
    %v347 = vunpack.c.l.b16 %v120
    %v348 = vunpack.c.l.b16 %v121
    %v349 = vunpack.c.l.b16 %v122
    %v350 = vunpack.c.l.b16 %v123
    %v351 = vunpack.c.l.b16 %v124
    %v352 = vunpack.c.l.b16 %v125
    %v353 = vunpack.c.l.b16 %v126
    %v354 = vunpack.c.l.b16 %v127
    %v355 = vunpack.c.l.b16 %v128
    %v356 = vunpack.c.l.b16 %v129
    %v357 = vpack.c.b16 %v260, %v259
    %v358 = vpack.c.b16 %v262, %v261
    %v359 = vpack.c.b16 %v264, %v263
    %v360 = vpack.c.b16 %v266, %v265
    %v361 = vpack.c.b16 %v268, %v267
    %v362 = vpack.c.b16 %v270, %v269
    %v363 = vpack.c.b16 %v272, %v271
    %v364 = vpack.c.b16 %v274, %v273
    %v365 = vpack.c.b16 %v276, %v275
    %v366 = vpack.c.b16 %v278, %v277
    %v367 = vpack.c.b16 %v280, %v279
    %v368 = vpack.c.b16 %v282, %v281
    %v369 = vpack.c.b16 %v284, %v283
    %v370 = vpack.c.b16 %v286, %v285
    %v371 = vpack.c.b16 %v288, %v287
    %v372 = vpack.c.b16 %v290, %v289
    %v373 = vpack.c.b16 %v292, %v291
    %v374 = vpack.c.b16 %v294, %v293
    %v375 = vpack.c.b16 %v296, %v295
    %v376 = vpack.c.b16 %v298, %v297
    %v377 = vpack.c.b16 %v300, %v299
    %v378 = vpack.c.b16 %v302, %v301
    %v379 = vpack.c.b16 %v304, %v303
    %v380 = vpack.c.b16 %v306, %v305
    %v381 = vpack.c.b16 %v308, %v307
    %v382 = vpack.c.b16 %v310, %v309
    %v383 = vpack.c.b16 %v312, %v311
    %v384 = vpack.c.b16 %v314, %v313
    %v385 = vpack.c.b16 %v316, %v315
    %v386 = vpack.c.b16 %v318, %v317
    %v387 = vpack.c.b16 %v320, %v319
    %v388 = vpack.c.b16 %v322, %v321
    %v389 = vpack.c.b16 %v324, %v323
    %v390 = vpack.c.b16 %v326, %v325
    %v391 = vpack.c.b16 %v328, %v327
    %v392 = vpack.c.b16 %v330, %v329
    %v393 = vpack.c.b16 %v332, %v331
    %v394 = vpack.c.b16 %v334, %v333
    %v395 = vpack.c.b16 %v336, %v335
    %v396 = vpack.c.b16 %v338, %v337
    %v397 = vpack.c.b16 %v340, %v339
    %v398 = vpack.c.b16 %v342, %v341
    %v399 = vpack.c.b16 %v344, %v343
    %v400 = vpack.c.b16 %v346, %v345
    %v401 = vpack.c.b16 %v348, %v347
    %v402 = vpack.c.b16 %v350, %v349
    %v403 = vpack.c.b16 %v352, %v351
    %v404 = vpack.c.b16 %v354, %v353
    %v405 = vpack.c.b16 %v356, %v355
    %vm455 = vcmask 130048
    %v457 = vsel %vm455, %v154, 0
    %459 = vmatprep.subr.bf16.mxu0 0
    %460 = vmatpush1.bf16.msra.mxu0 %v357
    %461 = vmatprep.subr.bf16.mxu0 0
    %462 = vmatpush1.bf16.msra.mxu0 %v358
    %463 = vmatprep.subr.bf16.mxu0 0
    %464 = vmatpush1.bf16.msra.mxu0 %v359
    %465 = vmatprep.subr.bf16.mxu0 0
    %466 = vmatpush1.bf16.msra.mxu0 %v360
    %467 = vmatprep.subr.bf16.mxu0 0
    %468 = vmatpush1.bf16.msra.mxu0 %v361
    %469 = vmatprep.subr.bf16.mxu0 0
    %470 = vmatpush1.bf16.msra.mxu0 %v362
    %471 = vmatprep.subr.bf16.mxu0 0
    %472 = vmatpush1.bf16.msra.mxu0 %v363
    %473 = vmatprep.subr.bf16.mxu0 0
    %474 = vmatpush1.bf16.msra.mxu0 %v364
    %475 = vmatprep.subr.bf16.mxu0 0
    %476 = vmatpush1.bf16.msra.mxu0 %v365
    %477 = vmatprep.subr.bf16.mxu0 0
    %478 = vmatpush1.bf16.msra.mxu0 %v366
    %479 = vmatprep.subr.bf16.mxu0 0
    %480 = vmatpush1.bf16.msra.mxu0 %v367
    %481 = vmatprep.subr.bf16.mxu0 0
    %482 = vmatpush1.bf16.msra.mxu0 %v368
    %483 = vmatprep.subr.bf16.mxu0 0
    %484 = vmatpush1.bf16.msra.mxu0 %v369
    %485 = vmatprep.subr.bf16.mxu0 0
    %486 = vmatpush1.bf16.msra.mxu0 %v370
    %487 = vmatprep.subr.bf16.mxu0 0
    %488 = vmatpush1.bf16.msra.mxu0 %v371
    %489 = vmatprep.subr.bf16.mxu0 0
    %490 = vmatpush1.bf16.msra.mxu0 %v372
    %491 = vmatprep.mubr.bf16.mxu0 %v149
    %492 = vmatmul.mubr.bf16.gmra.mrb[0].mxu0 %v148
    %v493 = vpop.f32.mrb[0].mxu0
    %v494 = vadd.f32 %v135, %v493
    %v495 = vpop.f32.mrb[0].mxu0
    %v496 = vpop.f32.mrb[0].mxu0
    %v497 = vpop.f32.mrb[0].mxu0
    %498 = vdwg.mxu0
    %499 = vmatprep.subr.bf16.mxu0 0
    %500 = vmatpush1.bf16.msra.mxu0 %v373
    %501 = vmatprep.subr.bf16.mxu0 0
    %502 = vmatpush1.bf16.msra.mxu0 %v374
    %503 = vmatprep.subr.bf16.mxu0 0
    %504 = vmatpush1.bf16.msra.mxu0 %v375
    %505 = vmatprep.subr.bf16.mxu0 0
    %506 = vmatpush1.bf16.msra.mxu0 %v376
    %507 = vmatprep.subr.bf16.mxu0 0
    %508 = vmatpush1.bf16.msra.mxu0 %v377
    %509 = vmatprep.subr.bf16.mxu0 0
    %510 = vmatpush1.bf16.msra.mxu0 %v378
    %511 = vmatprep.subr.bf16.mxu0 0
    %512 = vmatpush1.bf16.msra.mxu0 %v379
    %513 = vmatprep.subr.bf16.mxu0 0
    %514 = vmatpush1.bf16.msra.mxu0 %v380
    %515 = vmatprep.subr.bf16.mxu0 0
    %516 = vmatpush1.bf16.msra.mxu0 %v381
    %517 = vmatprep.subr.bf16.mxu0 0
    %518 = vmatpush1.bf16.msra.mxu0 %v382
    %519 = vmatprep.subr.bf16.mxu0 0
    %520 = vmatpush1.bf16.msra.mxu0 %v383
    %521 = vmatprep.subr.bf16.mxu0 0
    %522 = vmatpush1.bf16.msra.mxu0 %v384
    %523 = vmatprep.subr.bf16.mxu0 0
    %524 = vmatpush1.bf16.msra.mxu0 %v385
    %525 = vmatprep.subr.bf16.mxu0 0
    %526 = vmatpush1.bf16.msra.mxu0 %v386
    %527 = vmatprep.subr.bf16.mxu0 0
    %528 = vmatpush1.bf16.msra.mxu0 %v387
    %529 = vmatprep.subr.bf16.mxu0 0
    %530 = vmatpush1.bf16.msra.mxu0 %v388
    %531 = vmatprep.mubr.bf16.mxu0 %v151
    %532 = vmatmul.mubr.bf16.gmra.mrb[0].mxu0 %v150
    %v533 = vpop.f32.mrb[0].mxu0
    %v534 = vadd.f32 %v494, %v533
    %v535 = vpop.f32.mrb[0].mxu0
    %v536 = vpop.f32.mrb[0].mxu0
    %v537 = vpop.f32.mrb[0].mxu0
    %538 = vdwg.mxu0
    %539 = vmatprep.subr.bf16.mxu0 0
    %540 = vmatpush1.bf16.msra.mxu0 %v389
    %541 = vmatprep.subr.bf16.mxu0 0
    %542 = vmatpush1.bf16.msra.mxu0 %v390
    %543 = vmatprep.subr.bf16.mxu0 0
    %544 = vmatpush1.bf16.msra.mxu0 %v391
    %545 = vmatprep.subr.bf16.mxu0 0
    %546 = vmatpush1.bf16.msra.mxu0 %v392
    %547 = vmatprep.subr.bf16.mxu0 0
    %548 = vmatpush1.bf16.msra.mxu0 %v393
    %549 = vmatprep.subr.bf16.mxu0 0
    %550 = vmatpush1.bf16.msra.mxu0 %v394
    %551 = vmatprep.subr.bf16.mxu0 0
    %552 = vmatpush1.bf16.msra.mxu0 %v395
    %553 = vmatprep.subr.bf16.mxu0 0
    %554 = vmatpush1.bf16.msra.mxu0 %v396
    %555 = vmatprep.subr.bf16.mxu0 0
    %556 = vmatpush1.bf16.msra.mxu0 %v397
    %557 = vmatprep.subr.bf16.mxu0 0
    %558 = vmatpush1.bf16.msra.mxu0 %v398
    %559 = vmatprep.subr.bf16.mxu0 0
    %560 = vmatpush1.bf16.msra.mxu0 %v399
    %561 = vmatprep.subr.bf16.mxu0 0
    %562 = vmatpush1.bf16.msra.mxu0 %v400
    %563 = vmatprep.subr.bf16.mxu0 0
    %564 = vmatpush1.bf16.msra.mxu0 %v401
    %565 = vmatprep.subr.bf16.mxu0 0
    %566 = vmatpush1.bf16.msra.mxu0 %v402
    %567 = vmatprep.subr.bf16.mxu0 0
    %568 = vmatpush1.bf16.msra.mxu0 %v403
    %569 = vmatprep.subr.bf16.mxu0 0
    %570 = vmatpush1.bf16.msra.mxu0 %v404
    %571 = vmatprep.mubr.bf16.mxu0 %v153
    %572 = vmatmul.mubr.bf16.gmra.mrb[0].mxu0 %v152
    %v573 = vpop.f32.mrb[0].mxu0
    %v574 = vadd.f32 %v534, %v573
    %v575 = vpop.f32.mrb[0].mxu0
    %v576 = vpop.f32.mrb[0].mxu0
    %v577 = vpop.f32.mrb[0].mxu0
    %578 = vdwg.mxu0
    %579 = vmatprep.subr.bf16.mxu0 0
    %580 = vmatpush1.bf16.msra.mxu0 %v405
    %581 = vmatprep.subr.bf16.mxu0 0
    %582 = vmatpush1.bf16.msra.mxu0 0
    %583 = vmatprep.subr.bf16.mxu0 0
    %584 = vmatpush1.bf16.msra.mxu0 0
    %585 = vmatprep.subr.bf16.mxu0 0
    %586 = vmatpush1.bf16.msra.mxu0 0
    %587 = vmatprep.subr.bf16.mxu0 0
    %588 = vmatpush1.bf16.msra.mxu0 0
    %589 = vmatprep.subr.bf16.mxu0 0
    %590 = vmatpush1.bf16.msra.mxu0 0
    %591 = vmatprep.subr.bf16.mxu0 0
    %592 = vmatpush1.bf16.msra.mxu0 0
    %593 = vmatprep.subr.bf16.mxu0 0
    %594 = vmatpush1.bf16.msra.mxu0 0
    %595 = vmatprep.subr.bf16.mxu0 0
    %596 = vmatpush1.bf16.msra.mxu0 0
    %597 = vmatprep.subr.bf16.mxu0 0
    %598 = vmatpush1.bf16.msra.mxu0 0
    %599 = vmatprep.subr.bf16.mxu0 0
    %600 = vmatpush1.bf16.msra.mxu0 0
    %601 = vmatprep.subr.bf16.mxu0 0
    %602 = vmatpush1.bf16.msra.mxu0 0
    %603 = vmatprep.subr.bf16.mxu0 0
    %604 = vmatpush1.bf16.msra.mxu0 0
    %605 = vmatprep.subr.bf16.mxu0 0
    %606 = vmatpush1.bf16.msra.mxu0 0
    %607 = vmatprep.subr.bf16.mxu0 0
    %608 = vmatpush1.bf16.msra.mxu0 0
    %609 = vmatprep.subr.bf16.mxu0 0
    %610 = vmatpush1.bf16.msra.mxu0 0
    %611 = vmatprep.mubr.bf16.mxu0 0
    %612 = vmatmul.mubr.bf16.gmra.mrb[0].mxu0 %v457
    %v613 = vpop.f32.mrb[0].mxu0
    %v614 = vadd.f32 %v574, %v613
    %v615 = vpop.f32.mrb[0].mxu0
    %v616 = vpop.f32.mrb[0].mxu0
    %v617 = vpop.f32.mrb[0].mxu0
    %618 = vdwg.mxu0
    %v619 = vmax.f32 %v614, 0.0
    %v620 = vpack.c.bf16 %v619, %v619
    %v621 = vld [vmem:[%s3] sm:$0xf]
    %v622 = vld [vmem:[%s3 + $0x4] sm:$0xf]
    %v623 = vld [vmem:[%s3 + $0x8] sm:$0xf]
    %v624 = vld [vmem:[%s3 + $0xc] sm:$0xf]
    %v625 = vld [vmem:[%s3 + $0x10] sm:$0xf]
    %v626 = vld [vmem:[%s3 + $0x14] sm:$0xf]
    %v627 = vld [vmem:[%s3 + $0x18] sm:$0xf]
    %v628 = vld [vmem:[%s3 + $0x1c] sm:$0xf]
    %v629 = vld [vmem:[%s3 + $0x20] sm:$0xf]
    %v630 = vld [vmem:[%s3 + $0x24] sm:$0xf]
    %v631 = vld [vmem:[%s3 + $0x28] sm:$0xf]
    %v632 = vld [vmem:[%s3 + $0x2c] sm:$0xf]
    %v633 = vld [vmem:[%s3 + $0x30] sm:$0xf]
    %v634 = vld [vmem:[%s3 + $0x34] sm:$0xf]
    %v635 = vld [vmem:[%s3 + $0x38] sm:$0xf]
    %v636 = vld [vmem:[%s3 + $0x3c] sm:$0xf]
    %v637 = vld [vmem:[%s4] sm:$0x1]
    %v639 = vlaneseq
    %v640 = vshrl.u32 %v639, 7
    %v641 = vsub.s32 0, %v640
    %v642 = vrot.slane %v637, %v641
    %v660 = vunpack.c.l.b16 %v621
    %v661 = vunpack.c.l.b16 %v622
    %v662 = vunpack.c.l.b16 %v623
    %v663 = vunpack.c.l.b16 %v624
    %v664 = vunpack.c.l.b16 %v625
    %v665 = vunpack.c.l.b16 %v626
    %v666 = vunpack.c.l.b16 %v627
    %v667 = vunpack.c.l.b16 %v628
    %v668 = vunpack.c.l.b16 %v629
    %v669 = vunpack.c.l.b16 %v630
    %v670 = vunpack.c.l.b16 %v631
    %v671 = vunpack.c.l.b16 %v632
    %v672 = vunpack.c.l.b16 %v633
    %v673 = vunpack.c.l.b16 %v634
    %v674 = vunpack.c.l.b16 %v635
    %v675 = vunpack.c.l.b16 %v636
    %v676 = vpack.c.b16 %v661, %v660
    %v677 = vpack.c.b16 %v663, %v662
    %v678 = vpack.c.b16 %v665, %v664
    %v679 = vpack.c.b16 %v667, %v666
    %v680 = vpack.c.b16 %v669, %v668
    %v681 = vpack.c.b16 %v671, %v670
    %v682 = vpack.c.b16 %v673, %v672
    %v683 = vpack.c.b16 %v675, %v674
    %692 = vmatprep.subr.bf16.mxu0 0
    %693 = vmatpush1.bf16.msra.mxu0 %v676
    %694 = vmatprep.subr.bf16.mxu0 0
    %695 = vmatpush1.bf16.msra.mxu0 %v677
    %696 = vmatprep.subr.bf16.mxu0 0
    %697 = vmatpush1.bf16.msra.mxu0 %v678
    %698 = vmatprep.subr.bf16.mxu0 0
    %699 = vmatpush1.bf16.msra.mxu0 %v679
    %700 = vmatprep.subr.bf16.mxu0 0
    %701 = vmatpush1.bf16.msra.mxu0 %v680
    %702 = vmatprep.subr.bf16.mxu0 0
    %703 = vmatpush1.bf16.msra.mxu0 %v681
    %704 = vmatprep.subr.bf16.mxu0 0
    %705 = vmatpush1.bf16.msra.mxu0 %v682
    %706 = vmatprep.subr.bf16.mxu0 0
    %707 = vmatpush1.bf16.msra.mxu0 %v683
    %708 = vmatprep.subr.bf16.mxu0 0
    %709 = vmatpush1.bf16.msra.mxu0 0
    %710 = vmatprep.subr.bf16.mxu0 0
    %711 = vmatpush1.bf16.msra.mxu0 0
    %712 = vmatprep.subr.bf16.mxu0 0
    %713 = vmatpush1.bf16.msra.mxu0 0
    %714 = vmatprep.subr.bf16.mxu0 0
    %715 = vmatpush1.bf16.msra.mxu0 0
    %716 = vmatprep.subr.bf16.mxu0 0
    %717 = vmatpush1.bf16.msra.mxu0 0
    %718 = vmatprep.subr.bf16.mxu0 0
    %719 = vmatpush1.bf16.msra.mxu0 0
    %720 = vmatprep.subr.bf16.mxu0 0
    %721 = vmatpush1.bf16.msra.mxu0 0
    %722 = vmatprep.subr.bf16.mxu0 0
    %723 = vmatpush1.bf16.msra.mxu0 0
    %724 = vmatprep.mubr.bf16.mxu0 0
    %725 = vmatmul.mubr.bf16.gmra.mrb[0].mxu0 %v620
    %v726 = vpop.f32.mrb[0].mxu0
    %v727 = vadd.f32 %v642, %v726
    %v728 = vpop.f32.mrb[0].mxu0
    %v729 = vpop.f32.mrb[0].mxu0
    %v730 = vpop.f32.mrb[0].mxu0
    %731 = vdwg.mxu0
    %v732 = vmax.f32 %v727, 0.0
    %v733 = vpack.c.bf16 %v732, %v732
    %v734 = vld [vmem:[%s5] sm:$0xf]
    %v735 = vld [vmem:[%s5 + $0x4] sm:$0xf]
    %v736 = vld [vmem:[%s5 + $0x8] sm:$0xf]
    %v737 = vld [vmem:[%s5 + $0xc] sm:$0xf]
    %v738 = vld [vmem:[%s5 + $0x10] sm:$0xf]
    %v739 = vld [vmem:[%s5 + $0x14] sm:$0xf]
    %v740 = vld [vmem:[%s5 + $0x18] sm:$0xf]
    %v741 = vld [vmem:[%s5 + $0x1c] sm:$0xf]
    %v742 = vld [vmem:[%s5 + $0x20] sm:$0xf]
    %v743 = vld [vmem:[%s5 + $0x24] sm:$0xf]
    %v744 = vld [vmem:[%s5 + $0x28] sm:$0xf]
    %v745 = vld [vmem:[%s5 + $0x2c] sm:$0xf]
    %v746 = vld [vmem:[%s5 + $0x30] sm:$0xf]
    %v747 = vld [vmem:[%s5 + $0x34] sm:$0xf]
    %v748 = vld [vmem:[%s5 + $0x38] sm:$0xf]
    %v749 = vld [vmem:[%s5 + $0x3c] sm:$0xf]
    %v750 = vld [vmem:[%s6] sm:$0x1]
    %v752 = vlaneseq
    %v753 = vshrl.u32 %v752, 7
    %v754 = vsub.s32 0, %v753
    %v755 = vrot.slane %v750, %v754
    %v773 = vunpack.c.l.b16 %v734
    %v774 = vunpack.c.l.b16 %v735
    %v775 = vunpack.c.l.b16 %v736
    %v776 = vunpack.c.l.b16 %v737
    %v777 = vunpack.c.l.b16 %v738
    %v778 = vunpack.c.l.b16 %v739
    %v779 = vunpack.c.l.b16 %v740
    %v780 = vunpack.c.l.b16 %v741
    %v781 = vunpack.c.l.b16 %v742
    %v782 = vunpack.c.l.b16 %v743
    %v783 = vunpack.c.l.b16 %v744
    %v784 = vunpack.c.l.b16 %v745
    %v785 = vunpack.c.l.b16 %v746
    %v786 = vunpack.c.l.b16 %v747
    %v787 = vunpack.c.l.b16 %v748
    %v788 = vunpack.c.l.b16 %v749
    %v789 = vpack.c.b16 %v774, %v773
    %v790 = vpack.c.b16 %v776, %v775
    %v791 = vpack.c.b16 %v778, %v777
    %v792 = vpack.c.b16 %v780, %v779
    %v793 = vpack.c.b16 %v782, %v781
    %v794 = vpack.c.b16 %v784, %v783
    %v795 = vpack.c.b16 %v786, %v785
    %v796 = vpack.c.b16 %v788, %v787
    %805 = vmatprep.subr.bf16.mxu0 0
    %806 = vmatpush1.bf16.msra.mxu0 %v789
    %807 = vmatprep.subr.bf16.mxu0 0
    %808 = vmatpush1.bf16.msra.mxu0 %v790
    %809 = vmatprep.subr.bf16.mxu0 0
    %810 = vmatpush1.bf16.msra.mxu0 %v791
    %811 = vmatprep.subr.bf16.mxu0 0
    %812 = vmatpush1.bf16.msra.mxu0 %v792
    %813 = vmatprep.subr.bf16.mxu0 0
    %814 = vmatpush1.bf16.msra.mxu0 %v793
    %815 = vmatprep.subr.bf16.mxu0 0
    %816 = vmatpush1.bf16.msra.mxu0 %v794
    %817 = vmatprep.subr.bf16.mxu0 0
    %818 = vmatpush1.bf16.msra.mxu0 %v795
    %819 = vmatprep.subr.bf16.mxu0 0
    %820 = vmatpush1.bf16.msra.mxu0 %v796
    %821 = vmatprep.subr.bf16.mxu0 0
    %822 = vmatpush1.bf16.msra.mxu0 0
    %823 = vmatprep.subr.bf16.mxu0 0
    %824 = vmatpush1.bf16.msra.mxu0 0
    %825 = vmatprep.subr.bf16.mxu0 0
    %826 = vmatpush1.bf16.msra.mxu0 0
    %827 = vmatprep.subr.bf16.mxu0 0
    %828 = vmatpush1.bf16.msra.mxu0 0
    %829 = vmatprep.subr.bf16.mxu0 0
    %830 = vmatpush1.bf16.msra.mxu0 0
    %831 = vmatprep.subr.bf16.mxu0 0
    %832 = vmatpush1.bf16.msra.mxu0 0
    %833 = vmatprep.subr.bf16.mxu0 0
    %834 = vmatpush1.bf16.msra.mxu0 0
    %835 = vmatprep.subr.bf16.mxu0 0
    %836 = vmatpush1.bf16.msra.mxu0 0
    %837 = vmatprep.mubr.bf16.mxu0 0
    %838 = vmatmul.mubr.bf16.gmra.mrb[0].mxu0 %v733
    %v839 = vpop.f32.mrb[0].mxu0
    %v840 = vadd.f32 %v755, %v839
    %v841 = vpop.f32.mrb[0].mxu0
    %v842 = vpop.f32.mrb[0].mxu0
    %v843 = vpop.f32.mrb[0].mxu0
    %844 = vdwg.mxu0
    %v845 = vrot.slane %v840, 4
    %v846 = vmax.f32 %v840, %v845
    %v847 = vrot.slane %v846, 2
    %v848 = vmax.f32 %v846, %v847
    %v849 = vrot.slane %v848, 1
    %v850 = vmax.f32 %v848, %v849
    %v851 = vsub.f32 %v840, %v850
    %v852 = vmul.f32 %v851, 1.442695
    %v853 = vpow.pop %v852
    %v854 = vrot.slane %v853, 4
    %v855 = vadd.f32 %v853, %v854
    %v856 = vrot.slane %v855, 2
    %v857 = vadd.f32 %v855, %v856
    %v858 = vrot.slane %v857, 1
    %v859 = vadd.f32 %v857, %v858
    %v860 = vrcp.pop %v859
    %v861 = vmul.f32 %v853, %v860
    %862 = vst [vmem:[#allocation2] sm:$0xff] %v861
    // Predicated region
    $region30: #{mymodel_forward.1} parent=1 // pred_check
      _
    $region31: #{mymodel_forward.1} parent=1 // pred_check_branch
      %864 = sbr.rel (0) target = $region33
    $region32: #{mymodel_forward.1} parent=1 // pred_region
      %s866 = ssub.s32 128, 128
      %867 = vsyncadd [#allocation3], %s866
      %s869 = sshll.u32 [#allocation2], 4
      %s870 = int_to_ptr.vmem [resolvable:$true] %s869
      %872 = dma.vmem_to_hbm [thread:$0]  %s870, 128, %s7, [#allocation3]
    $region33: #{mymodel_forward.1} parent=1 // pred_fallthru
      _
    // Predicated region
    $region34: #{mymodel_forward.1} parent=1 // pred_check
      _
    $region35: #{mymodel_forward.1} parent=1 // pred_check_branch
      %874 = sbr.rel (0) target = $region37
    $region36: #{mymodel_forward.1} parent=1 // pred_region
      %875 = dma.done [#allocation3], 128
    $region37: #{mymodel_forward.1} parent=1 // pred_fallthru
      _
    %876 = vsyncpa [#allocation3], 1

</llo_original>
